<compile_context>
chip_gen: v6e
topology: v6e:2x2x1
jax: 0.10.0
libtpu: 0.0.40
codegen_flags: <defaults>
</compile_context>

<pallas_src>
import math

import jax
import jax.numpy as jnp
from jax.experimental import pallas as pl
from jax.experimental.pallas import tpu as pltpu

# ---- small shapes consistent with the module (d_model=32, n_heads=4) ----
B = 2     # batch_size
H = 4     # n_heads
L = 8     # max_len
DK = 8    # d_q = d_k = d_v per head


def sdpa_kernel(q_ref, k_ref, v_ref, mask_ref, out_ref, attn_ref):
    # q_ref/k_ref/v_ref: (H, L, DK) for the current batch element (batch dim squeezed)
    # mask_ref:          (1, L) key-position mask, 1.0 = attend, 0.0 = masked
    q = q_ref[...]
    k = k_ref[...]
    v = v_ref[...]
    mask = mask_ref[...]

    # fold 1/sqrt(d_k) into q once (DK lanes) instead of scaling (L, L) scores per head
    qs = q * jnp.float32(1.0 / math.sqrt(DK))

    # all heads in one batched MXU einsum (no per-head loop / concat)
    s = jnp.einsum("hqd,hkd->hqk", qs, k,
                   preferred_element_type=jnp.float32)            # (H, L, L)

    # masked_fill(mask == 0, -1e9): single hoisted select across all heads
    s = jnp.where(mask[None, :, :] == 0.0, jnp.float32(-1e9), s)

    # numerically stable softmax over keys; divide moved to the EUP
    s = s - jnp.max(s, axis=-1, keepdims=True)
    p = jnp.exp(s)
    denom = jnp.sum(p, axis=-1, keepdims=True)
    inv = pl.reciprocal(denom, approx=True)
    inv = inv * (2.0 - denom * inv)          # one Newton step -> full f32 precision
    p = p * inv

    attn_ref[...] = p.astype(attn_ref.dtype)
    out_ref[...] = jnp.einsum("hqk,hkd->hqd", p, v,
                              preferred_element_type=jnp.float32).astype(out_ref.dtype)


def scaled_dot_product_attention(query, key, value, mask):
    """query/key/value: (B, H, L, DK) f32; mask: (B, 1, 1, L) f32 (1 keep / 0 mask).
    Returns (weighted value (B, H, L, DK), attention weights (B, H, L, L))."""
    mask2 = mask.reshape(B, 1, L)   # wrapper-side reshape only (no data movement in-kernel)

    qkv_spec = pl.BlockSpec((pl.Squeezed(), H, L, DK), lambda b: (b, 0, 0, 0))

    return pl.pallas_call(
        sdpa_kernel,
        out_shape=(jax.ShapeDtypeStruct((B, H, L, DK), jnp.float32),
                   jax.ShapeDtypeStruct((B, H, L, L), jnp.float32)),
        grid_spec=pltpu.PrefetchScalarGridSpec(
            num_scalar_prefetch=0,
            grid=(B,),
            in_specs=[qkv_spec, qkv_spec, qkv_spec,
                      pl.BlockSpec((pl.Squeezed(), 1, L), lambda b: (b, 0, 0))],
            out_specs=(pl.BlockSpec((pl.Squeezed(), H, L, DK), lambda b: (b, 0, 0, 0)),
                       pl.BlockSpec((pl.Squeezed(), H, L, L), lambda b: (b, 0, 0, 0))),
        ),
        compiler_params=pltpu.CompilerParams(
            dimension_semantics=("parallel",)),   # v7x: shard batch across the 2 TCs
    )(query, key, value, mask2)


def sdpa_ref(query, key, value, mask):
    """Pure-JAX mirror of the PyTorch forward (dropout=None)."""
    d_k = query.shape[-1]
    scores = jnp.einsum("bhqd,bhkd->bhqk", query, key) / math.sqrt(d_k)
    scores = jnp.where(mask == 0.0, -1e9, scores)     # mask broadcasts (B,1,1,L)
    p_attn = jax.nn.softmax(scores, axis=-1)
    return jnp.einsum("bhqk,bhkd->bhqd", p_attn, value), p_attn


if __name__ == "__main__":
    root = jax.random.PRNGKey(0)
    kq, kk, kv = jax.random.split(root, 3)

    q = jax.random.normal(kq, (B, H, L, DK), jnp.float32)
    k = jax.random.normal(kk, (B, H, L, DK), jnp.float32)
    v = jax.random.normal(kv, (B, H, L, DK), jnp.float32)
    # byte-style mask (1 = attend, 0 = masked); last two key positions of batch 1 masked
    mask = jnp.ones((B, L), jnp.float32).at[1, -2:].set(0.0).reshape(B, 1, 1, L)

    out, p_attn = scaled_dot_product_attention(q, k, v, mask)
    jax.block_until_ready((out, p_attn))

    ref_out, ref_p = sdpa_ref(q, k, v, mask)
    assert out.shape == (B, H, L, DK) and p_attn.shape == (B, H, L, L)
    assert jnp.allclose(out, ref_out, atol=1e-4, rtol=1e-4), "weighted-value mismatch"
    assert jnp.allclose(p_attn, ref_p, atol=1e-4, rtol=1e-4), "attention-weights mismatch"

    print("KERNEL_OK")
</pallas_src>

<mosaic_0001>
module attributes {stable_mosaic.version = 11 : i64} {
  func.func @sdpa_kernel(%arg0: i32, %arg1: memref<1x4x8x8xf32, #tpu.memory_space<vmem>>, %arg2: memref<1x4x8x8xf32, #tpu.memory_space<vmem>>, %arg3: memref<1x4x8x8xf32, #tpu.memory_space<vmem>>, %arg4: memref<1x1x8xf32, #tpu.memory_space<vmem>>, %arg5: memref<1x4x8x8xf32, #tpu.memory_space<vmem>>, %arg6: memref<1x4x8x8xf32, #tpu.memory_space<vmem>>) attributes {dimension_semantics = [#tpu.dimension_semantics<parallel>], iteration_bounds = array<i64: 2>, scalar_prefetch = 0 : i64, scratch_operands = 0 : i64, tpu.core_type = #tpu.core_type<tc>, window_params = [{transform_indices = @transform_0, window_bounds = array<i64: 1, 4, 8, 8>}, {transform_indices = @transform_1, window_bounds = array<i64: 1, 4, 8, 8>}, {transform_indices = @transform_2, window_bounds = array<i64: 1, 4, 8, 8>}, {transform_indices = @transform_3, window_bounds = array<i64: 1, 1, 8>}, {transform_indices = @transform_4, window_bounds = array<i64: 1, 4, 8, 8>}, {transform_indices = @transform_5, window_bounds = array<i64: 1, 4, 8, 8>}]} {
    %c0 = arith.constant 0 : index
    %c0_0 = arith.constant 0 : index
    %c0_1 = arith.constant 0 : index
    %c0_2 = arith.constant 0 : index
    %0 = vector.load %arg1[%c0, %c0_0, %c0_1, %c0_2] : memref<1x4x8x8xf32, #tpu.memory_space<vmem>>, vector<1x4x8x8xf32>
    %1 = vector.shape_cast %0 : vector<1x4x8x8xf32> to vector<4x8x8xf32>
    %c0_3 = arith.constant 0 : index
    %c0_4 = arith.constant 0 : index
    %c0_5 = arith.constant 0 : index
    %c0_6 = arith.constant 0 : index
    %2 = vector.load %arg2[%c0_3, %c0_4, %c0_5, %c0_6] : memref<1x4x8x8xf32, #tpu.memory_space<vmem>>, vector<1x4x8x8xf32>
    %3 = vector.shape_cast %2 : vector<1x4x8x8xf32> to vector<4x8x8xf32>
    %c0_7 = arith.constant 0 : index
    %c0_8 = arith.constant 0 : index
    %c0_9 = arith.constant 0 : index
    %c0_10 = arith.constant 0 : index
    %4 = vector.load %arg3[%c0_7, %c0_8, %c0_9, %c0_10] : memref<1x4x8x8xf32, #tpu.memory_space<vmem>>, vector<1x4x8x8xf32>
    %5 = vector.shape_cast %4 : vector<1x4x8x8xf32> to vector<4x8x8xf32>
    %c0_11 = arith.constant 0 : index
    %c0_12 = arith.constant 0 : index
    %c0_13 = arith.constant 0 : index
    %6 = vector.load %arg4[%c0_11, %c0_12, %c0_13] : memref<1x1x8xf32, #tpu.memory_space<vmem>>, vector<1x1x8xf32>
    %7 = vector.shape_cast %6 : vector<1x1x8xf32> to vector<1x8xf32>
    %cst = arith.constant 0.353553385 : f32
    %8 = vector.broadcast %cst : f32 to vector<4x8x8xf32>
    %9 = arith.mulf %1, %8 : vector<4x8x8xf32>
    "tpu.trace_start"() <{level = 10 : i32, message = "hqd,hkd->hqk"}> : () -> ()
    %cst_14 = arith.constant dense<0.000000e+00> : vector<4x8x8xf32>
    %10 = tpu.matmul %9, %3, %cst_14 {dimension_numbers = #tpu.dot_dimension_numbers<[2], [2], [1], [1], [0, 0, 0, 1, 1, 1], [0], [0]>} : vector<4x8x8xf32>, vector<4x8x8xf32>, vector<4x8x8xf32> -> vector<4x8x8xf32>
    "tpu.trace_stop"() : () -> ()
    %11 = vector.shape_cast %7 : vector<1x8xf32> to vector<1x1x8xf32>
    %cst_15 = arith.constant 0.000000e+00 : f32
    %12 = vector.broadcast %cst_15 : f32 to vector<1x1x8xf32>
    %13 = arith.cmpf oeq, %11, %12 : vector<1x1x8xf32>
    %cst_16 = arith.constant -1.000000e+09 : f32
    %14 = vector.shape_cast %13 : vector<1x1x8xi1> to vector<1x1x8xi1>
    %15 = vector.broadcast %14 : vector<1x1x8xi1> to vector<4x8x8xi1>
    %16 = vector.broadcast %cst_16 : f32 to vector<4x8x8xf32>
    %17 = arith.select %15, %16, %10 : vector<4x8x8xi1>, vector<4x8x8xf32>
    %cst_17 = arith.constant dense<0xFF800000> : vector<4x8xf32>
    %18 = vector.multi_reduction <maximumf>, %17, %cst_17 [2] : vector<4x8x8xf32> to vector<4x8xf32>
    %19 = vector.shape_cast %18 : vector<4x8xf32> to vector<4x8x1xf32>
    %20 = vector.broadcast %19 : vector<4x8x1xf32> to vector<4x8x8xf32>
    %21 = arith.subf %17, %20 : vector<4x8x8xf32>
    %22 = math.exp %21 : vector<4x8x8xf32>
    %cst_18 = arith.constant dense<0.000000e+00> : vector<4x8xf32>
    %23 = vector.multi_reduction <add>, %22, %cst_18 [2] : vector<4x8x8xf32> to vector<4x8xf32>
    %24 = vector.shape_cast %23 : vector<4x8xf32> to vector<4x8x1xf32>
    %25 = tpu.reciprocal %24 {approx = true} : vector<4x8x1xf32> -> vector<4x8x1xf32>
    %26 = arith.mulf %24, %25 : vector<4x8x1xf32>
    %cst_19 = arith.constant 2.000000e+00 : f32
    %27 = vector.broadcast %cst_19 : f32 to vector<4x8x1xf32>
    %28 = arith.subf %27, %26 : vector<4x8x1xf32>
    %29 = arith.mulf %25, %28 : vector<4x8x1xf32>
    %30 = vector.broadcast %29 : vector<4x8x1xf32> to vector<4x8x8xf32>
    %31 = arith.mulf %22, %30 : vector<4x8x8xf32>
    %c0_20 = arith.constant 0 : index
    %c0_21 = arith.constant 0 : index
    %c0_22 = arith.constant 0 : index
    %c0_23 = arith.constant 0 : index
    %32 = vector.load %arg6[%c0_20, %c0_21, %c0_22, %c0_23] : memref<1x4x8x8xf32, #tpu.memory_space<vmem>>, vector<1x4x8x8xf32>
    %33 = vector.shape_cast %32 : vector<1x4x8x8xf32> to vector<4x8x8xf32>
    %34 = vector.shape_cast %31 : vector<4x8x8xf32> to vector<1x4x8x8xf32>
    tpu.vector_store %arg6[%c0_20, %c0_21, %c0_22, %c0_23], %34 {strides = array<i32>} : memref<1x4x8x8xf32, #tpu.memory_space<vmem>>, vector<1x4x8x8xf32>,
    "tpu.trace_start"() <{level = 10 : i32, message = "hqk,hkd->hqd"}> : () -> ()
    %cst_24 = arith.constant dense<0.000000e+00> : vector<4x8x8xf32>
    %35 = tpu.matmul %31, %5, %cst_24 {dimension_numbers = #tpu.dot_dimension_numbers<[2], [1], [1], [2], [0, 0, 0, 1, 1, 2], [0], [0]>} : vector<4x8x8xf32>, vector<4x8x8xf32>, vector<4x8x8xf32> -> vector<4x8x8xf32>
    "tpu.trace_stop"() : () -> ()
    %c0_25 = arith.constant 0 : index
    %c0_26 = arith.constant 0 : index
    %c0_27 = arith.constant 0 : index
    %c0_28 = arith.constant 0 : index
    %36 = vector.load %arg5[%c0_25, %c0_26, %c0_27, %c0_28] : memref<1x4x8x8xf32, #tpu.memory_space<vmem>>, vector<1x4x8x8xf32>
    %37 = vector.shape_cast %36 : vector<1x4x8x8xf32> to vector<4x8x8xf32>
    %38 = vector.shape_cast %35 : vector<4x8x8xf32> to vector<1x4x8x8xf32>
    tpu.vector_store %arg5[%c0_25, %c0_26, %c0_27, %c0_28], %38 {strides = array<i32>} : memref<1x4x8x8xf32, #tpu.memory_space<vmem>>, vector<1x4x8x8xf32>,
    return
  }
  func.func @transform_0(%arg0: i32) -> (i32, i32, i32, i32) {
    %c0_i32 = arith.constant 0 : i32
    %c0_i32_0 = arith.constant 0 : i32
    %c0_i32_1 = arith.constant 0 : i32
    %c0_i32_2 = arith.constant 0 : i32
    return %arg0, %c0_i32, %c0_i32_0, %c0_i32_1 : i32, i32, i32, i32
  }
  func.func @transform_1(%arg0: i32) -> (i32, i32, i32, i32) {
    %c0_i32 = arith.constant 0 : i32
    %c0_i32_0 = arith.constant 0 : i32
    %c0_i32_1 = arith.constant 0 : i32
    %c0_i32_2 = arith.constant 0 : i32
    return %arg0, %c0_i32, %c0_i32_0, %c0_i32_1 : i32, i32, i32, i32
  }
  func.func @transform_2(%arg0: i32) -> (i32, i32, i32, i32) {
    %c0_i32 = arith.constant 0 : i32
    %c0_i32_0 = arith.constant 0 : i32
    %c0_i32_1 = arith.constant 0 : i32
    %c0_i32_2 = arith.constant 0 : i32
    return %arg0, %c0_i32, %c0_i32_0, %c0_i32_1 : i32, i32, i32, i32
  }
  func.func @transform_3(%arg0: i32) -> (i32, i32, i32) {
    %c0_i32 = arith.constant 0 : i32
    %c0_i32_0 = arith.constant 0 : i32
    %c0_i32_1 = arith.constant 0 : i32
    return %arg0, %c0_i32, %c0_i32_0 : i32, i32, i32
  }
  func.func @transform_4(%arg0: i32) -> (i32, i32, i32, i32) {
    %c0_i32 = arith.constant 0 : i32
    %c0_i32_0 = arith.constant 0 : i32
    %c0_i32_1 = arith.constant 0 : i32
    %c0_i32_2 = arith.constant 0 : i32
    return %arg0, %c0_i32, %c0_i32_0, %c0_i32_1 : i32, i32, i32, i32
  }
  func.func @transform_5(%arg0: i32) -> (i32, i32, i32, i32) {
    %c0_i32 = arith.constant 0 : i32
    %c0_i32_0 = arith.constant 0 : i32
    %c0_i32_1 = arith.constant 0 : i32
    %c0_i32_2 = arith.constant 0 : i32
    return %arg0, %c0_i32, %c0_i32_0, %c0_i32_1 : i32, i32, i32, i32
  }
}

</mosaic_0001>

<llo_original>
// kernel: tpu_custom_call.1
$region0: #{tpu_custom_call.1}
  #allocation0 [shape = 'u32[]', space=smem, size = 0x4, offset = 0x4, fixed_abs, tag = 'smem constant byte address 0x4 - core index']
  #allocation1 [shape = 'u32[144,128]{1,0:T(1,128)}', space=vmem, size = 0x12000, scoped, tag = 'internal scratch']
  %s0 = inlined_call_operand.hbm [shape: f32[2,4,8,8], index: 0, kind: input, shape index: {}]
  %s1 = inlined_call_operand.hbm [shape: f32[2,4,8,8], index: 1, kind: input, shape index: {}]
  %s2 = inlined_call_operand.hbm [shape: f32[2,4,8,8], index: 2, kind: input, shape index: {}]
  %s3 = inlined_call_operand.vmem [shape: f32[2,1,8], index: 3, kind: input, shape index: {}]
  %s4 = inlined_call_operand.hbm [shape: f32[2,4,8,8], index: 4, kind: output, shape index: {0}]
  %s5 = inlined_call_operand.hbm [shape: f32[2,4,8,8], index: 5, kind: output, shape index: {1}]
  %6 = xla_tuple %s4, %s5
  %s7 = sld [smem:[#allocation0]]
  $region69: #{tpu_custom_call.1} parent=0
    _
  %s9 = ssub.s32 1, %s7
  %s10 = scalar_select 0, %s9, %s7
  $region1: #{tpu_custom_call.1} parent=0
    #allocation2 [shape = 'u8[32768]{0}', space=vmem, size = 0x8000, scoped, tag = 'input window, operand 0']
    #allocation3 [shape = 's32[2]{0}', space=sflag, size = 0x8, scoped, tag = 'scoped memory for tpu_custom_call.1']
    #allocation4 [shape = 's32[2]{0}', space=sflag, size = 0x8, scoped, tag = 'scoped memory for tpu_custom_call.1']
    #allocation5 [shape = 'u8[32768]{0}', space=vmem, size = 0x8000, scoped, tag = 'input window, operand 1']
    #allocation6 [shape = 's32[2]{0}', space=sflag, size = 0x8, scoped, tag = 'scoped memory for tpu_custom_call.1']
    #allocation7 [shape = 'u8[32768]{0}', space=vmem, size = 0x8000, scoped, tag = 'input window, operand 2']
    #allocation8 [shape = 'u8[32768]{0}', space=vmem, size = 0x8000, scoped, tag = 'output window, operand 0']
    #allocation9 [shape = 'u8[32768]{0}', space=vmem, size = 0x8000, scoped, tag = 'output window, operand 1']
    #allocation10 [shape = 's32[2]{0}', space=sflag, size = 0x8, scoped, tag = 'scoped memory for tpu_custom_call.1']
    %11 = vsyncpa [#allocation3], 0
    %s12 = scalar_lea.sflag [#allocation3], 1
    %13 = vsyncpa %s12, 0
    %14 = vsyncpa [#allocation6], 0
    %s15 = scalar_lea.sflag [#allocation6], 1
    %16 = vsyncpa %s15, 0
    %17 = vsyncpa [#allocation4], 0
    %s18 = scalar_lea.sflag [#allocation4], 1
    %19 = vsyncpa %s18, 0
    %20 = vsyncpa [#allocation10], 0
    %s21 = scalar_lea.sflag [#allocation10], 1
    %22 = vsyncpa %s21, 0
    loop: start=0, step=1, limit=4
    $region2: #{tpu_custom_call.1} parent=1 // loop_pre_header
      _
    $region3: #{tpu_custom_call.1} parent=1 // loop_header
      %s24 = sphi 0, %s28
      %p25 = scmp.ge.s32.totalorder %s24, 4
      %s34 = sphi 0, %s36
      %s37 = sphi 0, %s34
      %s38 = sphi 0, %s37
      %s54 = sphi 0, %s38
      %s60 = sphi 0, %s62
      %s63 = sphi 0, %s60
      %s64 = sphi 0, %s63
      %s80 = sphi 0, %s64
      %s86 = sphi 0, %s88
      %s89 = sphi 0, %s86
      %s90 = sphi 0, %s89
      %s106 = sphi 0, %s90
      %s112 = sphi 0, %s114
      %s115 = sphi 0, %s112
      %s116 = sphi 0, %s115
      %s132 = sphi 0, %s116
      %s138 = sphi 0, %s140
      %s141 = sphi 0, %s138
      %s142 = sphi 0, %s141
      %s158 = sphi 0, %s142
      %s164 = sphi 0, %s166
      %s167 = sphi 0, %s164
      %s168 = sphi 0, %s167
      %s184 = sphi 0, %s168
    $region4: #{tpu_custom_call.1} parent=1 // loop_header_branch
      %27 = sbr.rel (%p25) target = $region8
    $region5: #{tpu_custom_call.1} parent=1 // loop_body
      %s29 = ssub.s32 %s24, 1
      %s30 = ssub.s32 %s24, 2
      %s31 = sadd.s32 %s24, 1
      %s32 = ssub.s32 %s24, %s31
      %p33 = scmp.eq.s32.totalorder %s32, 0
      %s35 = sadd.s32 %s34, 1
      %s36 = scalar_select %p33, %s34, %s35
      %p39 = pneg %p33
      %p40 = scmp.eq.s32.totalorder %s24, 1
      %p41 = por %p39, %p40
      %p42 = scmp.ne.s32.totalorder %s34, %s37
      %p43 = scmp.eq.s32.totalorder %s24, 0
      %p44 = por %p42, %p43
      %p45 = scmp.ne.s32.totalorder %s34, %s37
      %p46 = scmp.eq.s32.totalorder %s29, 1
      %p47 = por %p45, %p46
      %p48 = scmp.ne.s32.totalorder %s37, %s38
      %p49 = scmp.eq.s32.totalorder %s29, 0
      %p50 = por %p48, %p49
      %p51 = scmp.ne.s32.totalorder %s37, %s38
      %p52 = scmp.eq.s32.totalorder %s30, 1
      %p53 = por %p51, %p52
      %p55 = scmp.ne.s32.totalorder %s38, %s54
      %p56 = scmp.eq.s32.totalorder %s30, 0
      %p57 = por %p55, %p56
      %s58 = ssub.s32 %s24, %s31
      %p59 = scmp.eq.s32.totalorder %s58, 0
      %s61 = sadd.s32 %s60, 1
      %s62 = scalar_select %p59, %s60, %s61
      %p65 = pneg %p59
      %p66 = scmp.eq.s32.totalorder %s24, 1
      %p67 = por %p65, %p66
      %p68 = scmp.ne.s32.totalorder %s60, %s63
      %p69 = scmp.eq.s32.totalorder %s24, 0
      %p70 = por %p68, %p69
      %p71 = scmp.ne.s32.totalorder %s60, %s63
      %p72 = scmp.eq.s32.totalorder %s29, 1
      %p73 = por %p71, %p72
      %p74 = scmp.ne.s32.totalorder %s63, %s64
      %p75 = scmp.eq.s32.totalorder %s29, 0
      %p76 = por %p74, %p75
      %p77 = scmp.ne.s32.totalorder %s63, %s64
      %p78 = scmp.eq.s32.totalorder %s30, 1
      %p79 = por %p77, %p78
      %p81 = scmp.ne.s32.totalorder %s64, %s80
      %p82 = scmp.eq.s32.totalorder %s30, 0
      %p83 = por %p81, %p82
      %s84 = ssub.s32 %s24, %s31
      %p85 = scmp.eq.s32.totalorder %s84, 0
      %s87 = sadd.s32 %s86, 1
      %s88 = scalar_select %p85, %s86, %s87
      %p91 = pneg %p85
      %p92 = scmp.eq.s32.totalorder %s24, 1
      %p93 = por %p91, %p92
      %p94 = scmp.ne.s32.totalorder %s86, %s89
      %p95 = scmp.eq.s32.totalorder %s24, 0
      %p96 = por %p94, %p95
      %p97 = scmp.ne.s32.totalorder %s86, %s89
      %p98 = scmp.eq.s32.totalorder %s29, 1
      %p99 = por %p97, %p98
      %p100 = scmp.ne.s32.totalorder %s89, %s90
      %p101 = scmp.eq.s32.totalorder %s29, 0
      %p102 = por %p100, %p101
      %p103 = scmp.ne.s32.totalorder %s89, %s90
      %p104 = scmp.eq.s32.totalorder %s30, 1
      %p105 = por %p103, %p104
      %p107 = scmp.ne.s32.totalorder %s90, %s106
      %p108 = scmp.eq.s32.totalorder %s30, 0
      %p109 = por %p107, %p108
      %s110 = ssub.s32 %s24, %s31
      %p111 = scmp.eq.s32.totalorder %s110, 0
      %s113 = sadd.s32 %s112, 1
      %s114 = scalar_select %p111, %s112, %s113
      %p117 = pneg %p111
      %p118 = scmp.eq.s32.totalorder %s24, 1
      %p119 = por %p117, %p118
      %p120 = scmp.ne.s32.totalorder %s112, %s115
      %p121 = scmp.eq.s32.totalorder %s24, 0
      %p122 = por %p120, %p121
      %p123 = scmp.ne.s32.totalorder %s112, %s115
      %p124 = scmp.eq.s32.totalorder %s29, 1
      %p125 = por %p123, %p124
      %p126 = scmp.ne.s32.totalorder %s115, %s116
      %p127 = scmp.eq.s32.totalorder %s29, 0
      %p128 = por %p126, %p127
      %p129 = scmp.ne.s32.totalorder %s115, %s116
      %p130 = scmp.eq.s32.totalorder %s30, 1
      %p131 = por %p129, %p130
      %p133 = scmp.ne.s32.totalorder %s116, %s132
      %p134 = scmp.eq.s32.totalorder %s30, 0
      %p135 = por %p133, %p134
      %s136 = ssub.s32 %s24, %s31
      %p137 = scmp.eq.s32.totalorder %s136, 0
      %s139 = sadd.s32 %s138, 1
      %s140 = scalar_select %p137, %s138, %s139
      %p143 = pneg %p137
      %p144 = scmp.eq.s32.totalorder %s24, 1
      %p145 = por %p143, %p144
      %p146 = scmp.ne.s32.totalorder %s138, %s141
      %p147 = scmp.eq.s32.totalorder %s24, 0
      %p148 = por %p146, %p147
      %p149 = scmp.ne.s32.totalorder %s138, %s141
      %p150 = scmp.eq.s32.totalorder %s29, 1
      %p151 = por %p149, %p150
      %p152 = scmp.ne.s32.totalorder %s141, %s142
      %p153 = scmp.eq.s32.totalorder %s29, 0
      %p154 = por %p152, %p153
      %p155 = scmp.ne.s32.totalorder %s141, %s142
      %p156 = scmp.eq.s32.totalorder %s30, 1
      %p157 = por %p155, %p156
      %p159 = scmp.ne.s32.totalorder %s142, %s158
      %p160 = scmp.eq.s32.totalorder %s30, 0
      %p161 = por %p159, %p160
      %s162 = ssub.s32 %s24, %s31
      %p163 = scmp.eq.s32.totalorder %s162, 0
      %s165 = sadd.s32 %s164, 1
      %s166 = scalar_select %p163, %s164, %s165
      %p169 = pneg %p163
      %p170 = scmp.eq.s32.totalorder %s24, 1
      %p171 = por %p169, %p170
      %p172 = scmp.ne.s32.totalorder %s164, %s167
      %p173 = scmp.eq.s32.totalorder %s24, 0
      %p174 = por %p172, %p173
      %p175 = scmp.ne.s32.totalorder %s164, %s167
      %p176 = scmp.eq.s32.totalorder %s29, 1
      %p177 = por %p175, %p176
      %p178 = scmp.ne.s32.totalorder %s167, %s168
      %p179 = scmp.eq.s32.totalorder %s29, 0
      %p180 = por %p178, %p179
      %p181 = scmp.ne.s32.totalorder %s167, %s168
      %p182 = scmp.eq.s32.totalorder %s30, 1
      %p183 = por %p181, %p182
      %p185 = scmp.ne.s32.totalorder %s168, %s184
      %p186 = scmp.eq.s32.totalorder %s30, 0
      %p187 = por %p185, %p186
      %p188 = scmp.le.s32.totalorder 1, %s24
      %p189 = scmp.lt.s32.totalorder %s24, 3
      %p190 = pnand %p188, %p189
      %p191 = pneg %p190
      // Predicated region
      $region9: #{tpu_custom_call.1} parent=5 // pred_check
        _
      $region10: #{tpu_custom_call.1} parent=5 // pred_check_branch
        %193 = sbr.rel (%p190) target = $region12
      $region11: #{tpu_custom_call.1} parent=5 // pred_region
        %s194 = ssub.s32 %s24, 1
      $region12: #{tpu_custom_call.1} parent=5 // pred_fallthru
        _
      %p195 = scmp.lt.s32.totalorder %s24, 2
      // Predicated region
      $region13: #{tpu_custom_call.1} parent=5 // pred_check
        %p196 = pneg %p195
      $region14: #{tpu_custom_call.1} parent=5 // pred_check_branch
        %198 = sbr.rel (%p196) target = $region16
      $region15: #{tpu_custom_call.1} parent=5 // pred_region
        // Predicated region
        $region17: #{tpu_custom_call.1} parent=15 // pred_check
          %p199 = pneg %p44
        $region18: #{tpu_custom_call.1} parent=15 // pred_check_branch
          %201 = sbr.rel (%p199) target = $region20
        $region19: #{tpu_custom_call.1} parent=15 // pred_region
          %s202 = sand.u32 %s34, 1
          %s203 = scalar_lea.sflag [#allocation3], %s202
          %s204 = sand.u32 %s34, 1
          %s205 = smul.addr %s204, 32
          %s206 = scalar_lea.vmem [#allocation2], %s205
          %s208 = ssub.s32 512, 512
          %209 = vsyncadd %s203, %s208
          %s210 = smul.addr %s24, 4
          %s211 = smul.addr %s210, 128
          %s212 = scalar_lea.hbm %s0, %s211
          %s213 = sshll.u32 %s206, 4
          %s214 = int_to_ptr.vmem [resolvable:$true] %s213
          %219 = dma.hbm_to_vmem [thread:$0]  %s212, 512, %s214, %s203, 128, 128, 8
        $region20: #{tpu_custom_call.1} parent=15 // pred_fallthru
          _
        // Predicated region
        $region21: #{tpu_custom_call.1} parent=15 // pred_check
          %p220 = pneg %p70
        $region22: #{tpu_custom_call.1} parent=15 // pred_check_branch
          %222 = sbr.rel (%p220) target = $region24
        $region23: #{tpu_custom_call.1} parent=15 // pred_region
          %s223 = sand.u32 %s24, 1
          %s224 = scalar_lea.sflag [#allocation6], %s223
          %s225 = sand.u32 %s60, 1
          %s226 = smul.addr %s225, 32
          %s227 = scalar_lea.vmem [#allocation5], %s226
          %s229 = ssub.s32 512, 512
          %230 = vsyncadd %s224, %s229
          %s231 = smul.addr %s24, 4
          %s232 = smul.addr %s231, 128
          %s233 = scalar_lea.hbm %s1, %s232
          %s234 = sshll.u32 %s227, 4
          %s235 = int_to_ptr.vmem [resolvable:$true] %s234
          %240 = dma.hbm_to_vmem [thread:$0]  %s233, 512, %s235, %s224, 128, 128, 8
        $region24: #{tpu_custom_call.1} parent=15 // pred_fallthru
          _
        // Predicated region
        $region25: #{tpu_custom_call.1} parent=15 // pred_check
          %p241 = pneg %p96
        $region26: #{tpu_custom_call.1} parent=15 // pred_check_branch
          %243 = sbr.rel (%p241) target = $region28
        $region27: #{tpu_custom_call.1} parent=15 // pred_region
          %s244 = sand.u32 %s24, 1
          %s245 = scalar_lea.sflag [#allocation6], %s244
          %s246 = sand.u32 %s86, 1
          %s247 = smul.addr %s246, 32
          %s248 = scalar_lea.vmem [#allocation7], %s247
          %s250 = ssub.s32 512, 512
          %251 = vsyncadd %s245, %s250
          %s252 = smul.addr %s24, 4
          %s253 = smul.addr %s252, 128
          %s254 = scalar_lea.hbm %s2, %s253
          %s255 = sshll.u32 %s248, 4
          %s256 = int_to_ptr.vmem [resolvable:$true] %s255
          %261 = dma.hbm_to_vmem [thread:$0]  %s254, 512, %s256, %s245, 128, 128, 8
        $region28: #{tpu_custom_call.1} parent=15 // pred_fallthru
          _
        // Predicated region
        $region29: #{tpu_custom_call.1} parent=15 // pred_check
          %p262 = pneg %p122
        $region30: #{tpu_custom_call.1} parent=15 // pred_check_branch
          %264 = sbr.rel (%p262) target = $region32
        $region31: #{tpu_custom_call.1} parent=15 // pred_region
          %p265 = scmp.lt.s32.totalorder %s24, 1
          %s266 = scalar_select %p265, %s24, 1
          %s267 = scalar_lea.vmem %s3, %s266
        $region32: #{tpu_custom_call.1} parent=15 // pred_fallthru
          _
      $region16: #{tpu_custom_call.1} parent=5 // pred_fallthru
        _
      %p268 = scmp.le.s32.totalorder 1, %s24
      %p269 = scmp.lt.s32.totalorder %s24, 3
      %p270 = pnand %p268, %p269
      %p271 = pneg %p270
      // Predicated region
      $region33: #{tpu_custom_call.1} parent=5 // pred_check
        _
      $region34: #{tpu_custom_call.1} parent=5 // pred_check_branch
        %273 = sbr.rel (%p270) target = $region36
      $region35: #{tpu_custom_call.1} parent=5 // pred_region
        %s274 = ssub.s32 %s24, 1
        %s275 = sand.u32 %s37, 1
        %s276 = scalar_lea.sflag [#allocation3], %s275
        %s277 = sand.u32 %s37, 1
        %s278 = smul.addr %s277, 32
        %s279 = scalar_lea.vmem [#allocation2], %s278
        // Predicated region
        $region37: #{tpu_custom_call.1} parent=35 // pred_check
          %p280 = pneg %p50
        $region38: #{tpu_custom_call.1} parent=35 // pred_check_branch
          %282 = sbr.rel (%p280) target = $region40
        $region39: #{tpu_custom_call.1} parent=35 // pred_region
          %283 = dma.done %s276, 512
        $region40: #{tpu_custom_call.1} parent=35 // pred_fallthru
          _
        %s284 = sand.u32 %s29, 1
        %s285 = scalar_lea.sflag [#allocation6], %s284
        %s286 = sand.u32 %s63, 1
        %s287 = smul.addr %s286, 32
        %s288 = scalar_lea.vmem [#allocation5], %s287
        // Predicated region
        $region41: #{tpu_custom_call.1} parent=35 // pred_check
          %p289 = pneg %p76
        $region42: #{tpu_custom_call.1} parent=35 // pred_check_branch
          %291 = sbr.rel (%p289) target = $region44
        $region43: #{tpu_custom_call.1} parent=35 // pred_region
          %292 = dma.done %s285, 512
        $region44: #{tpu_custom_call.1} parent=35 // pred_fallthru
          _
        %s293 = sand.u32 %s29, 1
        %s294 = scalar_lea.sflag [#allocation6], %s293
        %s295 = sand.u32 %s89, 1
        %s296 = smul.addr %s295, 32
        %s297 = scalar_lea.vmem [#allocation7], %s296
        // Predicated region
        $region45: #{tpu_custom_call.1} parent=35 // pred_check
          %p298 = pneg %p102
        $region46: #{tpu_custom_call.1} parent=35 // pred_check_branch
          %300 = sbr.rel (%p298) target = $region48
        $region47: #{tpu_custom_call.1} parent=35 // pred_region
          %301 = dma.done %s294, 512
        $region48: #{tpu_custom_call.1} parent=35 // pred_fallthru
          _
        %s302 = sand.u32 %s37, 1
        %s303 = scalar_lea.sflag [#allocation3], %s302
        %s304 = sand.u32 %s37, 1
        %s305 = smul.addr %s304, 32
        %s306 = scalar_lea.vmem [#allocation2], %s305
        %p307 = pneg %p50
        %p308 = pneg %p47
        %s309 = sand.u32 %s29, 1
        %s310 = scalar_lea.sflag [#allocation6], %s309
        %s311 = sand.u32 %s63, 1
        %s312 = smul.addr %s311, 32
        %s313 = scalar_lea.vmem [#allocation5], %s312
        %p314 = pneg %p76
        %p315 = pneg %p73
        %s316 = sand.u32 %s29, 1
        %s317 = scalar_lea.sflag [#allocation6], %s316
        %s318 = sand.u32 %s89, 1
        %s319 = smul.addr %s318, 32
        %s320 = scalar_lea.vmem [#allocation7], %s319
        %p321 = pneg %p102
        %p322 = pneg %p99
        %p323 = scmp.lt.s32.totalorder %s29, 1
        %s324 = scalar_select %p323, %s29, 1
        %s325 = scalar_lea.vmem %s3, %s324
        %p326 = pneg %p128
        %p327 = pneg %p125
        %p328 = pneg %p154
        %p329 = pneg %p151
        %s330 = sand.u32 %s141, 1
        %s331 = scalar_lea.sflag [#allocation4], %s330
        %s332 = sand.u32 %s141, 1
        %s333 = smul.addr %s332, 32
        %s334 = scalar_lea.vmem [#allocation8], %s333
        %p335 = pneg %p180
        %p336 = pneg %p177
        %s337 = sand.u32 %s167, 1
        %s338 = scalar_lea.sflag [#allocation10], %s337
        %s339 = sand.u32 %s167, 1
        %s340 = smul.addr %s339, 32
        %s341 = scalar_lea.vmem [#allocation9], %s340
        %p342 = scmp.lt.s32.totalorder %s29, 1
        %s343 = scalar_select %p342, %s29, 1
        %s344 = scalar_lea.vmem %s3, %s343
        %v345 = vld [vmem:[%s279] sm:$0xff]
        %v346 = vld [vmem:[%s279 + $0x8] sm:$0xff]
        %v347 = vld [vmem:[%s279 + $0x10] sm:$0xff]
        %v348 = vld [vmem:[%s279 + $0x18] sm:$0xff]
        %v349 = vld [vmem:[%s288] sm:$0xff]
        %v350 = vld [vmem:[%s288 + $0x8] sm:$0xff]
        %v351 = vld [vmem:[%s288 + $0x10] sm:$0xff]
        %v352 = vld [vmem:[%s288 + $0x18] sm:$0xff]
        %v353 = vld [vmem:[%s297] sm:$0xff]
        %v354 = vld [vmem:[%s297 + $0x8] sm:$0xff]
        %v355 = vld [vmem:[%s297 + $0x10] sm:$0xff]
        %v356 = vld [vmem:[%s297 + $0x18] sm:$0xff]
        %v357 = vld [vmem:[%s344] sm:$0x1]
        %v358 = vmul.f32 %v345, 0.35355338
        %v359 = vmul.f32 %v346, 0.35355338
        %v360 = vmul.f32 %v347, 0.35355338
        %v361 = vmul.f32 %v348, 0.35355338
        %vm362 = vcmask 64512
        %v364 = vsel %vm362, %v358, 0
        %v367 = vsel %vm362, %v349, 0
        %369 = vmatprep.subr.mxu0 0.0
        %370 = vmatpush1.xpose.msra.mxu0 0.0
        %371 = vmatprep.subr.mxu0 0.0
        %372 = vmatpush1.xpose.msra.mxu0 0.0
        %373 = vmatprep.subr.mxu0 0.0
        %374 = vmatpush1.xpose.msra.mxu0 0.0
        %375 = vmatprep.subr.mxu0 0.0
        %376 = vmatpush1.xpose.msra.mxu0 0.0
        %377 = vmatprep.subr.mxu0 0.0
        %378 = vmatpush1.xpose.msra.mxu0 0.0
        %379 = vmatprep.subr.mxu0 0.0
        %380 = vmatpush1.xpose.msra.mxu0 0.0
        %381 = vmatprep.subr.mxu0 0.0
        %382 = vmatpush1.xpose.msra.mxu0 0.0
        %383 = vmatprep.subr.mxu0 0.0
        %384 = vmatpush1.xpose.msra.mxu0 0.0
        %385 = vmatprep.subr.mxu0 0.0
        %386 = vmatpush1.xpose.msra.mxu0 0.0
        %387 = vmatprep.subr.mxu0 0.0
        %388 = vmatpush1.xpose.msra.mxu0 0.0
        %389 = vmatprep.subr.mxu0 0.0
        %390 = vmatpush1.xpose.msra.mxu0 0.0
        %391 = vmatprep.subr.mxu0 0.0
        %392 = vmatpush1.xpose.msra.mxu0 0.0
        %393 = vmatprep.subr.mxu0 0.0
        %394 = vmatpush1.xpose.msra.mxu0 0.0
        %395 = vmatprep.subr.mxu0 0.0
        %396 = vmatpush1.xpose.msra.mxu0 0.0
        %397 = vmatprep.subr.mxu0 0.0
        %398 = vmatpush1.xpose.msra.mxu0 0.0
        %399 = vmatprep.subr.mxu0 0.0
        %400 = vmatpush1.xpose.msra.mxu0 %v367
        %401 = vmatprep.subr.mxu0 0.0
        %402 = vmatpush2.xpose.msra.mxu0 0.0
        %403 = vmatprep.subr.mxu0 0.0
        %404 = vmatpush2.xpose.msra.mxu0 0.0
        %405 = vmatprep.subr.mxu0 0.0
        %406 = vmatpush2.xpose.msra.mxu0 0.0
        %407 = vmatprep.subr.mxu0 0.0
        %408 = vmatpush2.xpose.msra.mxu0 0.0
        %409 = vmatprep.subr.mxu0 0.0
        %410 = vmatpush2.xpose.msra.mxu0 0.0
        %411 = vmatprep.subr.mxu0 0.0
        %412 = vmatpush2.xpose.msra.mxu0 0.0
        %413 = vmatprep.subr.mxu0 0.0
        %414 = vmatpush2.xpose.msra.mxu0 0.0
        %415 = vmatprep.subr.mxu0 0.0
        %416 = vmatpush2.xpose.msra.mxu0 0.0
        %417 = vmatprep.subr.mxu0 0.0
        %418 = vmatpush2.xpose.msra.mxu0 0.0
        %419 = vmatprep.subr.mxu0 0.0
        %420 = vmatpush2.xpose.msra.mxu0 0.0
        %421 = vmatprep.subr.mxu0 0.0
        %422 = vmatpush2.xpose.msra.mxu0 0.0
        %423 = vmatprep.subr.mxu0 0.0
        %424 = vmatpush2.xpose.msra.mxu0 0.0
        %425 = vmatprep.subr.mxu0 0.0
        %426 = vmatpush2.xpose.msra.mxu0 0.0
        %427 = vmatprep.subr.mxu0 0.0
        %428 = vmatpush2.xpose.msra.mxu0 0.0
        %429 = vmatprep.subr.mxu0 0.0
        %430 = vmatpush2.xpose.msra.mxu0 0.0
        %431 = vmatprep.subr.mxu0 0.0
        %432 = vmatpush2.xpose.msra.mxu0 0.0
        %433 = vmatprep.mubr.f32.mxu0 0.0
        %434 = vmatmul.mubr.f32.gmra.mxu0 %v364
        %v435 = vpop.f32.mrf.mxu0
        %v436 = vadd.f32 0.0, %v435
        %v437 = vpop.f32.mrf.mxu0
        %438 = vdwg.mxu0
        %v440 = vsel %vm362, %v359, 0
        %v443 = vsel %vm362, %v350, 0
        %445 = vmatprep.subr.mxu0 0.0
        %446 = vmatpush1.xpose.msra.mxu0 0.0
        %447 = vmatprep.subr.mxu0 0.0
        %448 = vmatpush1.xpose.msra.mxu0 0.0
        %449 = vmatprep.subr.mxu0 0.0
        %450 = vmatpush1.xpose.msra.mxu0 0.0
        %451 = vmatprep.subr.mxu0 0.0
        %452 = vmatpush1.xpose.msra.mxu0 0.0
        %453 = vmatprep.subr.mxu0 0.0
        %454 = vmatpush1.xpose.msra.mxu0 0.0
        %455 = vmatprep.subr.mxu0 0.0
        %456 = vmatpush1.xpose.msra.mxu0 0.0
        %457 = vmatprep.subr.mxu0 0.0
        %458 = vmatpush1.xpose.msra.mxu0 0.0
        %459 = vmatprep.subr.mxu0 0.0
        %460 = vmatpush1.xpose.msra.mxu0 0.0
        %461 = vmatprep.subr.mxu0 0.0
        %462 = vmatpush1.xpose.msra.mxu0 0.0
        %463 = vmatprep.subr.mxu0 0.0
        %464 = vmatpush1.xpose.msra.mxu0 0.0
        %465 = vmatprep.subr.mxu0 0.0
        %466 = vmatpush1.xpose.msra.mxu0 0.0
        %467 = vmatprep.subr.mxu0 0.0
        %468 = vmatpush1.xpose.msra.mxu0 0.0
        %469 = vmatprep.subr.mxu0 0.0
        %470 = vmatpush1.xpose.msra.mxu0 0.0
        %471 = vmatprep.subr.mxu0 0.0
        %472 = vmatpush1.xpose.msra.mxu0 0.0
        %473 = vmatprep.subr.mxu0 0.0
        %474 = vmatpush1.xpose.msra.mxu0 0.0
        %475 = vmatprep.subr.mxu0 0.0
        %476 = vmatpush1.xpose.msra.mxu0 %v443
        %477 = vmatprep.subr.mxu0 0.0
        %478 = vmatpush2.xpose.msra.mxu0 0.0
        %479 = vmatprep.subr.mxu0 0.0
        %480 = vmatpush2.xpose.msra.mxu0 0.0
        %481 = vmatprep.subr.mxu0 0.0
        %482 = vmatpush2.xpose.msra.mxu0 0.0
        %483 = vmatprep.subr.mxu0 0.0
        %484 = vmatpush2.xpose.msra.mxu0 0.0
        %485 = vmatprep.subr.mxu0 0.0
        %486 = vmatpush2.xpose.msra.mxu0 0.0
        %487 = vmatprep.subr.mxu0 0.0
        %488 = vmatpush2.xpose.msra.mxu0 0.0
        %489 = vmatprep.subr.mxu0 0.0
        %490 = vmatpush2.xpose.msra.mxu0 0.0
        %491 = vmatprep.subr.mxu0 0.0
        %492 = vmatpush2.xpose.msra.mxu0 0.0
        %493 = vmatprep.subr.mxu0 0.0
        %494 = vmatpush2.xpose.msra.mxu0 0.0
        %495 = vmatprep.subr.mxu0 0.0
        %496 = vmatpush2.xpose.msra.mxu0 0.0
        %497 = vmatprep.subr.mxu0 0.0
        %498 = vmatpush2.xpose.msra.mxu0 0.0
        %499 = vmatprep.subr.mxu0 0.0
        %500 = vmatpush2.xpose.msra.mxu0 0.0
        %501 = vmatprep.subr.mxu0 0.0
        %502 = vmatpush2.xpose.msra.mxu0 0.0
        %503 = vmatprep.subr.mxu0 0.0
        %504 = vmatpush2.xpose.msra.mxu0 0.0
        %505 = vmatprep.subr.mxu0 0.0
        %506 = vmatpush2.xpose.msra.mxu0 0.0
        %507 = vmatprep.subr.mxu0 0.0
        %508 = vmatpush2.xpose.msra.mxu0 0.0
        %509 = vmatprep.mubr.f32.mxu0 0.0
        %510 = vmatmul.mubr.f32.gmra.mxu0 %v440
        %v511 = vpop.f32.mrf.mxu0
        %v512 = vadd.f32 0.0, %v511
        %v513 = vpop.f32.mrf.mxu0
        %514 = vdwg.mxu0
        %v516 = vsel %vm362, %v360, 0
        %v519 = vsel %vm362, %v351, 0
        %521 = vmatprep.subr.mxu0 0.0
        %522 = vmatpush1.xpose.msra.mxu0 0.0
        %523 = vmatprep.subr.mxu0 0.0
        %524 = vmatpush1.xpose.msra.mxu0 0.0
        %525 = vmatprep.subr.mxu0 0.0
        %526 = vmatpush1.xpose.msra.mxu0 0.0
        %527 = vmatprep.subr.mxu0 0.0
        %528 = vmatpush1.xpose.msra.mxu0 0.0
        %529 = vmatprep.subr.mxu0 0.0
        %530 = vmatpush1.xpose.msra.mxu0 0.0
        %531 = vmatprep.subr.mxu0 0.0
        %532 = vmatpush1.xpose.msra.mxu0 0.0
        %533 = vmatprep.subr.mxu0 0.0
        %534 = vmatpush1.xpose.msra.mxu0 0.0
        %535 = vmatprep.subr.mxu0 0.0
        %536 = vmatpush1.xpose.msra.mxu0 0.0
        %537 = vmatprep.subr.mxu0 0.0
        %538 = vmatpush1.xpose.msra.mxu0 0.0
        %539 = vmatprep.subr.mxu0 0.0
        %540 = vmatpush1.xpose.msra.mxu0 0.0
        %541 = vmatprep.subr.mxu0 0.0
        %542 = vmatpush1.xpose.msra.mxu0 0.0
        %543 = vmatprep.subr.mxu0 0.0
        %544 = vmatpush1.xpose.msra.mxu0 0.0
        %545 = vmatprep.subr.mxu0 0.0
        %546 = vmatpush1.xpose.msra.mxu0 0.0
        %547 = vmatprep.subr.mxu0 0.0
        %548 = vmatpush1.xpose.msra.mxu0 0.0
        %549 = vmatprep.subr.mxu0 0.0
        %550 = vmatpush1.xpose.msra.mxu0 0.0
        %551 = vmatprep.subr.mxu0 0.0
        %552 = vmatpush1.xpose.msra.mxu0 %v519
        %553 = vmatprep.subr.mxu0 0.0
        %554 = vmatpush2.xpose.msra.mxu0 0.0
        %555 = vmatprep.subr.mxu0 0.0
        %556 = vmatpush2.xpose.msra.mxu0 0.0
        %557 = vmatprep.subr.mxu0 0.0
        %558 = vmatpush2.xpose.msra.mxu0 0.0
        %559 = vmatprep.subr.mxu0 0.0
        %560 = vmatpush2.xpose.msra.mxu0 0.0
        %561 = vmatprep.subr.mxu0 0.0
        %562 = vmatpush2.xpose.msra.mxu0 0.0
        %563 = vmatprep.subr.mxu0 0.0
        %564 = vmatpush2.xpose.msra.mxu0 0.0
        %565 = vmatprep.subr.mxu0 0.0
        %566 = vmatpush2.xpose.msra.mxu0 0.0
        %567 = vmatprep.subr.mxu0 0.0
        %568 = vmatpush2.xpose.msra.mxu0 0.0
        %569 = vmatprep.subr.mxu0 0.0
        %570 = vmatpush2.xpose.msra.mxu0 0.0
        %571 = vmatprep.subr.mxu0 0.0
        %572 = vmatpush2.xpose.msra.mxu0 0.0
        %573 = vmatprep.subr.mxu0 0.0
        %574 = vmatpush2.xpose.msra.mxu0 0.0
        %575 = vmatprep.subr.mxu0 0.0
        %576 = vmatpush2.xpose.msra.mxu0 0.0
        %577 = vmatprep.subr.mxu0 0.0
        %578 = vmatpush2.xpose.msra.mxu0 0.0
        %579 = vmatprep.subr.mxu0 0.0
        %580 = vmatpush2.xpose.msra.mxu0 0.0
        %581 = vmatprep.subr.mxu0 0.0
        %582 = vmatpush2.xpose.msra.mxu0 0.0
        %583 = vmatprep.subr.mxu0 0.0
        %584 = vmatpush2.xpose.msra.mxu0 0.0
        %585 = vmatprep.mubr.f32.mxu0 0.0
        %586 = vmatmul.mubr.f32.gmra.mxu0 %v516
        %v587 = vpop.f32.mrf.mxu0
        %v588 = vadd.f32 0.0, %v587
        %v589 = vpop.f32.mrf.mxu0
        %590 = vdwg.mxu0
        %v592 = vsel %vm362, %v361, 0
        %v595 = vsel %vm362, %v352, 0
        %597 = vmatprep.subr.mxu0 0.0
        %598 = vmatpush1.xpose.msra.mxu0 0.0
        %599 = vmatprep.subr.mxu0 0.0
        %600 = vmatpush1.xpose.msra.mxu0 0.0
        %601 = vmatprep.subr.mxu0 0.0
        %602 = vmatpush1.xpose.msra.mxu0 0.0
        %603 = vmatprep.subr.mxu0 0.0
        %604 = vmatpush1.xpose.msra.mxu0 0.0
        %605 = vmatprep.subr.mxu0 0.0
        %606 = vmatpush1.xpose.msra.mxu0 0.0
        %607 = vmatprep.subr.mxu0 0.0
        %608 = vmatpush1.xpose.msra.mxu0 0.0
        %609 = vmatprep.subr.mxu0 0.0
        %610 = vmatpush1.xpose.msra.mxu0 0.0
        %611 = vmatprep.subr.mxu0 0.0
        %612 = vmatpush1.xpose.msra.mxu0 0.0
        %613 = vmatprep.subr.mxu0 0.0
        %614 = vmatpush1.xpose.msra.mxu0 0.0
        %615 = vmatprep.subr.mxu0 0.0
        %616 = vmatpush1.xpose.msra.mxu0 0.0
        %617 = vmatprep.subr.mxu0 0.0
        %618 = vmatpush1.xpose.msra.mxu0 0.0
        %619 = vmatprep.subr.mxu0 0.0
        %620 = vmatpush1.xpose.msra.mxu0 0.0
        %621 = vmatprep.subr.mxu0 0.0
        %622 = vmatpush1.xpose.msra.mxu0 0.0
        %623 = vmatprep.subr.mxu0 0.0
        %624 = vmatpush1.xpose.msra.mxu0 0.0
        %625 = vmatprep.subr.mxu0 0.0
        %626 = vmatpush1.xpose.msra.mxu0 0.0
        %627 = vmatprep.subr.mxu0 0.0
        %628 = vmatpush1.xpose.msra.mxu0 %v595
        %629 = vmatprep.subr.mxu0 0.0
        %630 = vmatpush2.xpose.msra.mxu0 0.0
        %631 = vmatprep.subr.mxu0 0.0
        %632 = vmatpush2.xpose.msra.mxu0 0.0
        %633 = vmatprep.subr.mxu0 0.0
        %634 = vmatpush2.xpose.msra.mxu0 0.0
        %635 = vmatprep.subr.mxu0 0.0
        %636 = vmatpush2.xpose.msra.mxu0 0.0
        %637 = vmatprep.subr.mxu0 0.0
        %638 = vmatpush2.xpose.msra.mxu0 0.0
        %639 = vmatprep.subr.mxu0 0.0
        %640 = vmatpush2.xpose.msra.mxu0 0.0
        %641 = vmatprep.subr.mxu0 0.0
        %642 = vmatpush2.xpose.msra.mxu0 0.0
        %643 = vmatprep.subr.mxu0 0.0
        %644 = vmatpush2.xpose.msra.mxu0 0.0
        %645 = vmatprep.subr.mxu0 0.0
        %646 = vmatpush2.xpose.msra.mxu0 0.0
        %647 = vmatprep.subr.mxu0 0.0
        %648 = vmatpush2.xpose.msra.mxu0 0.0
        %649 = vmatprep.subr.mxu0 0.0
        %650 = vmatpush2.xpose.msra.mxu0 0.0
        %651 = vmatprep.subr.mxu0 0.0
        %652 = vmatpush2.xpose.msra.mxu0 0.0
        %653 = vmatprep.subr.mxu0 0.0
        %654 = vmatpush2.xpose.msra.mxu0 0.0
        %655 = vmatprep.subr.mxu0 0.0
        %656 = vmatpush2.xpose.msra.mxu0 0.0
        %657 = vmatprep.subr.mxu0 0.0
        %658 = vmatpush2.xpose.msra.mxu0 0.0
        %659 = vmatprep.subr.mxu0 0.0
        %660 = vmatpush2.xpose.msra.mxu0 0.0
        %661 = vmatprep.mubr.f32.mxu0 0.0
        %662 = vmatmul.mubr.f32.gmra.mxu0 %v592
        %v663 = vpop.f32.mrf.mxu0
        %v664 = vadd.f32 0.0, %v663
        %v665 = vpop.f32.mrf.mxu0
        %666 = vdwg.mxu0
        %vm667 = vcmp.eq.f32.partialorder %v357, 0.0
        %v668 = vsel %vm667, 1, 0
        %v669 = vlaneseq
        %v670 = vshrl.u32 %v669, 7
        %v671 = vsub.s32 0, %v670
        %v672 = vrot.slane %v668, %v671
        %vm673 = vcmp.eq.s32.totalorder %v672, 1
        %v674 = vsel %vm673, -1e+09, %v436
        %v675 = vsel %vm673, -1e+09, %v512
        %v676 = vsel %vm673, -1e+09, %v588
        %v677 = vsel %vm673, -1e+09, %v664
        %v678 = vsel %vm362, %v674, -inf
        %679 = vmax.xlane.f32.xlu0 %v678
        %v680 = vpop.xlane.xlu0 %679
        %v681 = vsel %vm362, %v675, -inf
        %682 = vmax.xlane.f32.xlu0 %v681
        %v683 = vpop.xlane.xlu0 %682
        %v684 = vsel %vm362, %v676, -inf
        %685 = vmax.xlane.f32.xlu0 %v684
        %v686 = vpop.xlane.xlu0 %685
        %v687 = vsel %vm362, %v677, -inf
        %688 = vmax.xlane.f32.xlu0 %v687
        %v689 = vpop.xlane.xlu0 %688
        %v690 = vsub.f32 %v674, %v680
        %v691 = vsub.f32 %v675, %v683
        %v692 = vsub.f32 %v676, %v686
        %v693 = vsub.f32 %v677, %v689
        %v694 = vmul.f32 %v690, 1.442695
        %v695 = vpow.pop %v694
        %v696 = vmul.f32 %v691, 1.442695
        %v697 = vpow.pop %v696
        %v698 = vmul.f32 %v692, 1.442695
        %v699 = vpow.pop %v698
        %v700 = vmul.f32 %v693, 1.442695
        %v701 = vpow.pop %v700
        %v702 = vsel %vm362, %v695, 0.0
        %703 = vadd.xlane.f32.xlu0 %v702
        %v704 = vpop.xlane.xlu0 %703
        %v705 = vsel %vm362, %v697, 0.0
        %706 = vadd.xlane.f32.xlu0 %v705
        %v707 = vpop.xlane.xlu0 %706
        %v708 = vsel %vm362, %v699, 0.0
        %709 = vadd.xlane.f32.xlu0 %v708
        %v710 = vpop.xlane.xlu0 %709
        %v711 = vsel %vm362, %v701, 0.0
        %712 = vadd.xlane.f32.xlu0 %v711
        %v713 = vpop.xlane.xlu0 %712
        %v714 = vrcp.pop %v704
        %v715 = vrcp.pop %v707
        %v716 = vrcp.pop %v710
        %v717 = vrcp.pop %v713
        %v718 = vmul.f32 %v704, %v714
        %v719 = vmul.f32 %v707, %v715
        %v720 = vmul.f32 %v710, %v716
        %v721 = vmul.f32 %v713, %v717
        %v722 = vsub.f32 2.0, %v718
        %v723 = vsub.f32 2.0, %v719
        %v724 = vsub.f32 2.0, %v720
        %v725 = vsub.f32 2.0, %v721
        %v726 = vmul.f32 %v714, %v722
        %v727 = vmul.f32 %v715, %v723
        %v728 = vmul.f32 %v716, %v724
        %v729 = vmul.f32 %v717, %v725
        %v730 = vmul.f32 %v695, %v726
        %v731 = vmul.f32 %v697, %v727
        %v732 = vmul.f32 %v699, %v728
        %v733 = vmul.f32 %v701, %v729
        %734 = vst.msk [vmem:[%s341] sm:$0xff] %vm362, %v730
        %735 = vst.msk [vmem:[%s341 + $0x8] sm:$0xff] %vm362, %v731
        %736 = vst.msk [vmem:[%s341 + $0x10] sm:$0xff] %vm362, %v732
        %737 = vst.msk [vmem:[%s341 + $0x18] sm:$0xff] %vm362, %v733
        %v739 = vsel %vm362, %v730, 0
        %741 = vmatprep.subr.mxu0 0.0
        %742 = vmatpush1.msra.mxu0 0.0
        %743 = vmatprep.subr.mxu0 0.0
        %744 = vmatpush1.msra.mxu0 0.0
        %745 = vmatprep.subr.mxu0 0.0
        %746 = vmatpush1.msra.mxu0 0.0
        %747 = vmatprep.subr.mxu0 0.0
        %748 = vmatpush1.msra.mxu0 0.0
        %749 = vmatprep.subr.mxu0 0.0
        %750 = vmatpush1.msra.mxu0 0.0
        %751 = vmatprep.subr.mxu0 0.0
        %752 = vmatpush1.msra.mxu0 0.0
        %753 = vmatprep.subr.mxu0 0.0
        %754 = vmatpush1.msra.mxu0 0.0
        %755 = vmatprep.subr.mxu0 0.0
        %756 = vmatpush1.msra.mxu0 0.0
        %757 = vmatprep.subr.mxu0 0.0
        %758 = vmatpush1.msra.mxu0 0.0
        %759 = vmatprep.subr.mxu0 0.0
        %760 = vmatpush1.msra.mxu0 0.0
        %761 = vmatprep.subr.mxu0 0.0
        %762 = vmatpush1.msra.mxu0 0.0
        %763 = vmatprep.subr.mxu0 0.0
        %764 = vmatpush1.msra.mxu0 0.0
        %765 = vmatprep.subr.mxu0 0.0
        %766 = vmatpush1.msra.mxu0 0.0
        %767 = vmatprep.subr.mxu0 0.0
        %768 = vmatpush1.msra.mxu0 0.0
        %769 = vmatprep.subr.mxu0 0.0
        %770 = vmatpush1.msra.mxu0 0.0
        %771 = vmatprep.subr.mxu0 0.0
        %772 = vmatpush1.msra.mxu0 %v353
        %773 = vmatprep.subr.mxu0 0.0
        %774 = vmatpush2.msra.mxu0 0.0
        %775 = vmatprep.subr.mxu0 0.0
        %776 = vmatpush2.msra.mxu0 0.0
        %777 = vmatprep.subr.mxu0 0.0
        %778 = vmatpush2.msra.mxu0 0.0
        %779 = vmatprep.subr.mxu0 0.0
        %780 = vmatpush2.msra.mxu0 0.0
        %781 = vmatprep.subr.mxu0 0.0
        %782 = vmatpush2.msra.mxu0 0.0
        %783 = vmatprep.subr.mxu0 0.0
        %784 = vmatpush2.msra.mxu0 0.0
        %785 = vmatprep.subr.mxu0 0.0
        %786 = vmatpush2.msra.mxu0 0.0
        %787 = vmatprep.subr.mxu0 0.0
        %788 = vmatpush2.msra.mxu0 0.0
        %789 = vmatprep.subr.mxu0 0.0
        %790 = vmatpush2.msra.mxu0 0.0
        %791 = vmatprep.subr.mxu0 0.0
        %792 = vmatpush2.msra.mxu0 0.0
        %793 = vmatprep.subr.mxu0 0.0
        %794 = vmatpush2.msra.mxu0 0.0
        %795 = vmatprep.subr.mxu0 0.0
        %796 = vmatpush2.msra.mxu0 0.0
        %797 = vmatprep.subr.mxu0 0.0
        %798 = vmatpush2.msra.mxu0 0.0
        %799 = vmatprep.subr.mxu0 0.0
        %800 = vmatpush2.msra.mxu0 0.0
        %801 = vmatprep.subr.mxu0 0.0
        %802 = vmatpush2.msra.mxu0 0.0
        %803 = vmatprep.subr.mxu0 0.0
        %804 = vmatpush2.msra.mxu0 0.0
        %805 = vmatprep.mubr.f32.mxu0 0.0
        %806 = vmatmul.mubr.f32.gmra.mxu0 %v739
        %v807 = vpop.f32.mrf.mxu0
        %v808 = vadd.f32 0.0, %v807
        %v809 = vpop.f32.mrf.mxu0
        %810 = vdwg.mxu0
        %v812 = vsel %vm362, %v731, 0
        %814 = vmatprep.subr.mxu0 0.0
        %815 = vmatpush1.msra.mxu0 0.0
        %816 = vmatprep.subr.mxu0 0.0
        %817 = vmatpush1.msra.mxu0 0.0
        %818 = vmatprep.subr.mxu0 0.0
        %819 = vmatpush1.msra.mxu0 0.0
        %820 = vmatprep.subr.mxu0 0.0
        %821 = vmatpush1.msra.mxu0 0.0
        %822 = vmatprep.subr.mxu0 0.0
        %823 = vmatpush1.msra.mxu0 0.0
        %824 = vmatprep.subr.mxu0 0.0
        %825 = vmatpush1.msra.mxu0 0.0
        %826 = vmatprep.subr.mxu0 0.0
        %827 = vmatpush1.msra.mxu0 0.0
        %828 = vmatprep.subr.mxu0 0.0
        %829 = vmatpush1.msra.mxu0 0.0
        %830 = vmatprep.subr.mxu0 0.0
        %831 = vmatpush1.msra.mxu0 0.0
        %832 = vmatprep.subr.mxu0 0.0
        %833 = vmatpush1.msra.mxu0 0.0
        %834 = vmatprep.subr.mxu0 0.0
        %835 = vmatpush1.msra.mxu0 0.0
        %836 = vmatprep.subr.mxu0 0.0
        %837 = vmatpush1.msra.mxu0 0.0
        %838 = vmatprep.subr.mxu0 0.0
        %839 = vmatpush1.msra.mxu0 0.0
        %840 = vmatprep.subr.mxu0 0.0
        %841 = vmatpush1.msra.mxu0 0.0
        %842 = vmatprep.subr.mxu0 0.0
        %843 = vmatpush1.msra.mxu0 0.0
        %844 = vmatprep.subr.mxu0 0.0
        %845 = vmatpush1.msra.mxu0 %v354
        %846 = vmatprep.subr.mxu0 0.0
        %847 = vmatpush2.msra.mxu0 0.0
        %848 = vmatprep.subr.mxu0 0.0
        %849 = vmatpush2.msra.mxu0 0.0
        %850 = vmatprep.subr.mxu0 0.0
        %851 = vmatpush2.msra.mxu0 0.0
        %852 = vmatprep.subr.mxu0 0.0
        %853 = vmatpush2.msra.mxu0 0.0
        %854 = vmatprep.subr.mxu0 0.0
        %855 = vmatpush2.msra.mxu0 0.0
        %856 = vmatprep.subr.mxu0 0.0
        %857 = vmatpush2.msra.mxu0 0.0
        %858 = vmatprep.subr.mxu0 0.0
        %859 = vmatpush2.msra.mxu0 0.0
        %860 = vmatprep.subr.mxu0 0.0
        %861 = vmatpush2.msra.mxu0 0.0
        %862 = vmatprep.subr.mxu0 0.0
        %863 = vmatpush2.msra.mxu0 0.0
        %864 = vmatprep.subr.mxu0 0.0
        %865 = vmatpush2.msra.mxu0 0.0
        %866 = vmatprep.subr.mxu0 0.0
        %867 = vmatpush2.msra.mxu0 0.0
        %868 = vmatprep.subr.mxu0 0.0
        %869 = vmatpush2.msra.mxu0 0.0
        %870 = vmatprep.subr.mxu0 0.0
        %871 = vmatpush2.msra.mxu0 0.0
        %872 = vmatprep.subr.mxu0 0.0
        %873 = vmatpush2.msra.mxu0 0.0
        %874 = vmatprep.subr.mxu0 0.0
        %875 = vmatpush2.msra.mxu0 0.0
        %876 = vmatprep.subr.mxu0 0.0
        %877 = vmatpush2.msra.mxu0 0.0
        %878 = vmatprep.mubr.f32.mxu0 0.0
        %879 = vmatmul.mubr.f32.gmra.mxu0 %v812
        %v880 = vpop.f32.mrf.mxu0
        %v881 = vadd.f32 0.0, %v880
        %v882 = vpop.f32.mrf.mxu0
        %883 = vdwg.mxu0
        %v885 = vsel %vm362, %v732, 0
        %887 = vmatprep.subr.mxu0 0.0
        %888 = vmatpush1.msra.mxu0 0.0
        %889 = vmatprep.subr.mxu0 0.0
        %890 = vmatpush1.msra.mxu0 0.0
        %891 = vmatprep.subr.mxu0 0.0
        %892 = vmatpush1.msra.mxu0 0.0
        %893 = vmatprep.subr.mxu0 0.0
        %894 = vmatpush1.msra.mxu0 0.0
        %895 = vmatprep.subr.mxu0 0.0
        %896 = vmatpush1.msra.mxu0 0.0
        %897 = vmatprep.subr.mxu0 0.0
        %898 = vmatpush1.msra.mxu0 0.0
        %899 = vmatprep.subr.mxu0 0.0
        %900 = vmatpush1.msra.mxu0 0.0
        %901 = vmatprep.subr.mxu0 0.0
        %902 = vmatpush1.msra.mxu0 0.0
        %903 = vmatprep.subr.mxu0 0.0
        %904 = vmatpush1.msra.mxu0 0.0
        %905 = vmatprep.subr.mxu0 0.0
        %906 = vmatpush1.msra.mxu0 0.0
        %907 = vmatprep.subr.mxu0 0.0
        %908 = vmatpush1.msra.mxu0 0.0
        %909 = vmatprep.subr.mxu0 0.0
        %910 = vmatpush1.msra.mxu0 0.0
        %911 = vmatprep.subr.mxu0 0.0
        %912 = vmatpush1.msra.mxu0 0.0
        %913 = vmatprep.subr.mxu0 0.0
        %914 = vmatpush1.msra.mxu0 0.0
        %915 = vmatprep.subr.mxu0 0.0
        %916 = vmatpush1.msra.mxu0 0.0
        %917 = vmatprep.subr.mxu0 0.0
        %918 = vmatpush1.msra.mxu0 %v355
        %919 = vmatprep.subr.mxu0 0.0
        %920 = vmatpush2.msra.mxu0 0.0
        %921 = vmatprep.subr.mxu0 0.0
        %922 = vmatpush2.msra.mxu0 0.0
        %923 = vmatprep.subr.mxu0 0.0
        %924 = vmatpush2.msra.mxu0 0.0
        %925 = vmatprep.subr.mxu0 0.0
        %926 = vmatpush2.msra.mxu0 0.0
        %927 = vmatprep.subr.mxu0 0.0
        %928 = vmatpush2.msra.mxu0 0.0
        %929 = vmatprep.subr.mxu0 0.0
        %930 = vmatpush2.msra.mxu0 0.0
        %931 = vmatprep.subr.mxu0 0.0
        %932 = vmatpush2.msra.mxu0 0.0
        %933 = vmatprep.subr.mxu0 0.0
        %934 = vmatpush2.msra.mxu0 0.0
        %935 = vmatprep.subr.mxu0 0.0
        %936 = vmatpush2.msra.mxu0 0.0
        %937 = vmatprep.subr.mxu0 0.0
        %938 = vmatpush2.msra.mxu0 0.0
        %939 = vmatprep.subr.mxu0 0.0
        %940 = vmatpush2.msra.mxu0 0.0
        %941 = vmatprep.subr.mxu0 0.0
        %942 = vmatpush2.msra.mxu0 0.0
        %943 = vmatprep.subr.mxu0 0.0
        %944 = vmatpush2.msra.mxu0 0.0
        %945 = vmatprep.subr.mxu0 0.0
        %946 = vmatpush2.msra.mxu0 0.0
        %947 = vmatprep.subr.mxu0 0.0
        %948 = vmatpush2.msra.mxu0 0.0
        %949 = vmatprep.subr.mxu0 0.0
        %950 = vmatpush2.msra.mxu0 0.0
        %951 = vmatprep.mubr.f32.mxu0 0.0
        %952 = vmatmul.mubr.f32.gmra.mxu0 %v885
        %v953 = vpop.f32.mrf.mxu0
        %v954 = vadd.f32 0.0, %v953
        %v955 = vpop.f32.mrf.mxu0
        %956 = vdwg.mxu0
        %v958 = vsel %vm362, %v733, 0
        %960 = vmatprep.subr.mxu0 0.0
        %961 = vmatpush1.msra.mxu0 0.0
        %962 = vmatprep.subr.mxu0 0.0
        %963 = vmatpush1.msra.mxu0 0.0
        %964 = vmatprep.subr.mxu0 0.0
        %965 = vmatpush1.msra.mxu0 0.0
        %966 = vmatprep.subr.mxu0 0.0
        %967 = vmatpush1.msra.mxu0 0.0
        %968 = vmatprep.subr.mxu0 0.0
        %969 = vmatpush1.msra.mxu0 0.0
        %970 = vmatprep.subr.mxu0 0.0
        %971 = vmatpush1.msra.mxu0 0.0
        %972 = vmatprep.subr.mxu0 0.0
        %973 = vmatpush1.msra.mxu0 0.0
        %974 = vmatprep.subr.mxu0 0.0
        %975 = vmatpush1.msra.mxu0 0.0
        %976 = vmatprep.subr.mxu0 0.0
        %977 = vmatpush1.msra.mxu0 0.0
        %978 = vmatprep.subr.mxu0 0.0
        %979 = vmatpush1.msra.mxu0 0.0
        %980 = vmatprep.subr.mxu0 0.0
        %981 = vmatpush1.msra.mxu0 0.0
        %982 = vmatprep.subr.mxu0 0.0
        %983 = vmatpush1.msra.mxu0 0.0
        %984 = vmatprep.subr.mxu0 0.0
        %985 = vmatpush1.msra.mxu0 0.0
        %986 = vmatprep.subr.mxu0 0.0
        %987 = vmatpush1.msra.mxu0 0.0
        %988 = vmatprep.subr.mxu0 0.0
        %989 = vmatpush1.msra.mxu0 0.0
        %990 = vmatprep.subr.mxu0 0.0
        %991 = vmatpush1.msra.mxu0 %v356
        %992 = vmatprep.subr.mxu0 0.0
        %993 = vmatpush2.msra.mxu0 0.0
        %994 = vmatprep.subr.mxu0 0.0
        %995 = vmatpush2.msra.mxu0 0.0
        %996 = vmatprep.subr.mxu0 0.0
        %997 = vmatpush2.msra.mxu0 0.0
        %998 = vmatprep.subr.mxu0 0.0
        %999 = vmatpush2.msra.mxu0 0.0
        %1000 = vmatprep.subr.mxu0 0.0
        %1001 = vmatpush2.msra.mxu0 0.0
        %1002 = vmatprep.subr.mxu0 0.0
        %1003 = vmatpush2.msra.mxu0 0.0
        %1004 = vmatprep.subr.mxu0 0.0
        %1005 = vmatpush2.msra.mxu0 0.0
        %1006 = vmatprep.subr.mxu0 0.0
        %1007 = vmatpush2.msra.mxu0 0.0
        %1008 = vmatprep.subr.mxu0 0.0
        %1009 = vmatpush2.msra.mxu0 0.0
        %1010 = vmatprep.subr.mxu0 0.0
        %1011 = vmatpush2.msra.mxu0 0.0
        %1012 = vmatprep.subr.mxu0 0.0
        %1013 = vmatpush2.msra.mxu0 0.0
        %1014 = vmatprep.subr.mxu0 0.0
        %1015 = vmatpush2.msra.mxu0 0.0
        %1016 = vmatprep.subr.mxu0 0.0
        %1017 = vmatpush2.msra.mxu0 0.0
        %1018 = vmatprep.subr.mxu0 0.0
        %1019 = vmatpush2.msra.mxu0 0.0
        %1020 = vmatprep.subr.mxu0 0.0
        %1021 = vmatpush2.msra.mxu0 0.0
        %1022 = vmatprep.subr.mxu0 0.0
        %1023 = vmatpush2.msra.mxu0 0.0
        %1024 = vmatprep.mubr.f32.mxu0 0.0
        %1025 = vmatmul.mubr.f32.gmra.mxu0 %v958
        %v1026 = vpop.f32.mrf.mxu0
        %v1027 = vadd.f32 0.0, %v1026
        %v1028 = vpop.f32.mrf.mxu0
        %1029 = vdwg.mxu0
        %1030 = vst.msk [vmem:[%s334] sm:$0xff] %vm362, %v808
        %1031 = vst.msk [vmem:[%s334 + $0x8] sm:$0xff] %vm362, %v881
        %1032 = vst.msk [vmem:[%s334 + $0x10] sm:$0xff] %vm362, %v954
        %1033 = vst.msk [vmem:[%s334 + $0x18] sm:$0xff] %vm362, %v1027
        %s1034 = sand.u32 %s141, 1
        %s1035 = scalar_lea.sflag [#allocation4], %s1034
        %s1036 = sand.u32 %s141, 1
        %s1037 = smul.addr %s1036, 32
        %s1038 = scalar_lea.vmem [#allocation8], %s1037
        %s1039 = sand.u32 %s167, 1
        %s1040 = scalar_lea.sflag [#allocation10], %s1039
        %s1041 = sand.u32 %s167, 1
        %s1042 = smul.addr %s1041, 32
        %s1043 = scalar_lea.vmem [#allocation9], %s1042
        // Predicated region
        $region49: #{tpu_custom_call.1} parent=35 // pred_check
          %p1044 = pneg %p151
        $region50: #{tpu_custom_call.1} parent=35 // pred_check_branch
          %1046 = sbr.rel (%p1044) target = $region52
        $region51: #{tpu_custom_call.1} parent=35 // pred_region
          %s1048 = ssub.s32 512, 512
          %1049 = vsyncadd %s1035, %s1048
          %s1050 = smul.addr %s29, 4
          %s1051 = smul.addr %s1050, 128
          %s1052 = scalar_lea.hbm %s4, %s1051
          %s1053 = sshll.u32 %s1038, 4
          %s1054 = int_to_ptr.vmem [resolvable:$true] %s1053
          %1059 = dma.vmem_to_hbm [thread:$0]  %s1054, 512, %s1052, %s1035, 128, 128, 8
        $region52: #{tpu_custom_call.1} parent=35 // pred_fallthru
          _
        // Predicated region
        $region53: #{tpu_custom_call.1} parent=35 // pred_check
          %p1060 = pneg %p177
        $region54: #{tpu_custom_call.1} parent=35 // pred_check_branch
          %1062 = sbr.rel (%p1060) target = $region56
        $region55: #{tpu_custom_call.1} parent=35 // pred_region
          %s1064 = ssub.s32 512, 512
          %1065 = vsyncadd %s1040, %s1064
          %s1066 = smul.addr %s29, 4
          %s1067 = smul.addr %s1066, 128
          %s1068 = scalar_lea.hbm %s5, %s1067
          %s1069 = sshll.u32 %s1043, 4
          %s1070 = int_to_ptr.vmem [resolvable:$true] %s1069
          %1075 = dma.vmem_to_hbm [thread:$0]  %s1070, 512, %s1068, %s1040, 128, 128, 8
        $region56: #{tpu_custom_call.1} parent=35 // pred_fallthru
          _
      $region36: #{tpu_custom_call.1} parent=5 // pred_fallthru
        _
      %p1076 = scmp.le.s32.totalorder 2, %s24
      // Predicated region
      $region57: #{tpu_custom_call.1} parent=5 // pred_check
        %p1077 = pneg %p1076
      $region58: #{tpu_custom_call.1} parent=5 // pred_check_branch
        %1079 = sbr.rel (%p1077) target = $region60
      $region59: #{tpu_custom_call.1} parent=5 // pred_region
        %s1080 = ssub.s32 %s24, 2
        // Predicated region
        $region61: #{tpu_custom_call.1} parent=59 // pred_check
          %p1081 = pneg %p157
        $region62: #{tpu_custom_call.1} parent=59 // pred_check_branch
          %1083 = sbr.rel (%p1081) target = $region64
        $region63: #{tpu_custom_call.1} parent=59 // pred_region
          %s1084 = sand.u32 %s142, 1
          %s1085 = scalar_lea.sflag [#allocation4], %s1084
          %s1086 = sand.u32 %s142, 1
          %s1087 = smul.addr %s1086, 32
          %s1088 = scalar_lea.vmem [#allocation8], %s1087
          %1089 = dma.done %s1085, 512
        $region64: #{tpu_custom_call.1} parent=59 // pred_fallthru
          _
        // Predicated region
        $region65: #{tpu_custom_call.1} parent=59 // pred_check
          %p1090 = pneg %p183
        $region66: #{tpu_custom_call.1} parent=59 // pred_check_branch
          %1092 = sbr.rel (%p1090) target = $region68
        $region67: #{tpu_custom_call.1} parent=59 // pred_region
          %s1093 = sand.u32 %s168, 1
          %s1094 = scalar_lea.sflag [#allocation10], %s1093
          %s1095 = sand.u32 %s168, 1
          %s1096 = smul.addr %s1095, 32
          %s1097 = scalar_lea.vmem [#allocation9], %s1096
          %1098 = dma.done %s1094, 512
        $region68: #{tpu_custom_call.1} parent=59 // pred_fallthru
          _
      $region60: #{tpu_custom_call.1} parent=5 // pred_fallthru
        _
    $region6: #{tpu_custom_call.1} parent=1 // loop_footer
      %s28 = sadd.s32 1, %s24
    $region7: #{tpu_custom_call.1} parent=1 // loop_footer_branch
      %23 = sbr.rel target = $region3
    $region8: #{tpu_custom_call.1} parent=1 // loop_exit
      _
    %1099 = vsyncpa [#allocation3], 1
    %s1100 = scalar_lea.sflag [#allocation3], 1
    %1101 = vsyncpa %s1100, 1
    %1102 = vsyncpa [#allocation6], 1
    %s1103 = scalar_lea.sflag [#allocation6], 1
    %1104 = vsyncpa %s1103, 1
    %1105 = vsyncpa [#allocation4], 1
    %s1106 = scalar_lea.sflag [#allocation4], 1
    %1107 = vsyncpa %s1106, 1
    %1108 = vsyncpa [#allocation10], 1
    %s1109 = scalar_lea.sflag [#allocation10], 1
    %1110 = vsyncpa %s1109, 1

</llo_original>
